<compile_context>
chip_gen: v6e
topology: v6e:2x2x1
jax: 0.10.0
libtpu: 0.0.40
codegen_flags: <defaults>
</compile_context>

<pallas_src>
import math

import jax
import jax.numpy as jnp
from jax.experimental import pallas as pl
from jax.experimental.pallas import tpu as pltpu


def _round_up(x, m):
    return ((x + m - 1) // m) * m


# ---------------------------------------------------------------------------
# Kernel 1: weight sampling  w = mean + exp(log_sigma / 2) * eps   (-> bf16)
# ---------------------------------------------------------------------------
def _sample_weight_kernel(wm_ref, wls_ref, ew_ref, w_out_ref):
    # Sampling math in f32 (v5e VPU/EUP have no bf16); cast only on the way out.
    w = wm_ref[...] + jnp.exp(wls_ref[...] * 0.5) * ew_ref[...]
    w_out_ref[...] = w.astype(w_out_ref.dtype)


def _sample_weight(wm_t, wls_t, ew_t):
    """wm_t / wls_t / ew_t: [KK, Cout] f32  ->  sampled weight [KK, Cout] bf16."""
    kk, c_out = wm_t.shape
    # Cout block: lane-dense 128 when possible, else the full (small) dim.
    tc = 128 if c_out % 128 == 0 else c_out
    # KK block: halve while it stays a multiple of 8 (and divides KK) so the
    # per-step footprint is bounded even for very large layers.
    tk = kk
    while tk > 512 and tk % 16 == 0:
        tk //= 2
    grid = (kk // tk, c_out // tc)
    spec = pl.BlockSpec((tk, tc), lambda i, j: (i, j))
    return pl.pallas_call(
        _sample_weight_kernel,
        out_shape=jax.ShapeDtypeStruct((kk, c_out), jnp.bfloat16),
        grid=grid,
        in_specs=[spec, spec, spec],
        out_specs=spec,
        compiler_params=pltpu.CompilerParams(
            dimension_semantics=("parallel", "parallel")),
    )(wm_t, wls_t, ew_t)


# ---------------------------------------------------------------------------
# Kernel 2: im2col GEMM + bias sampling/add (bf16 operands, f32 accumulation)
# ---------------------------------------------------------------------------
def _gemm_bias_kernel(p_ref, w_ref, bm_ref, bls_ref, eb_ref, o_ref):
    acc = jnp.dot(p_ref[...], w_ref[...], preferred_element_type=jnp.float32)
    # Bias sampling folded into the epilogue (eps_b == 0 in eval mode).
    bias = bm_ref[...] + jnp.exp(bls_ref[...] * 0.5) * eb_ref[...]
    o_ref[...] = (acc + bias).astype(o_ref.dtype)


def _plan_gemm(m, kk, c_out, out_el_bytes):
    """Choose (tm, tn, weight_resident, vmem_limit) with lane/sublane-padded
    VMEM budgeting (a (tm, kk) bf16 tile really occupies
    tm * round_up(kk, 128) * 2 bytes in VMEM)."""
    kk_lanes = _round_up(kk, 128)
    co_lanes = _round_up(c_out, 128)
    w_vmem = _round_up(kk, 16) * co_lanes * 2              # bf16 weight, padded

    # Keep the whole sampled weight resident in VMEM (fetched once) when it
    # fits; a Cout that is not a 128-multiple must be a full-dim block anyway.
    resident = (c_out % 128 != 0) or (w_vmem <= (8 << 20))
    tn = None if resident else (256 if c_out % 256 == 0 else 128)

    out_lanes = co_lanes if resident else tn
    w_stream = w_vmem if resident else _round_up(kk, 16) * tn * 2

    def footprint(tm_):
        patch = tm_ * kk_lanes * 2                          # bf16 patch tile
        out = tm_ * out_lanes * out_el_bytes
        per_iter = patch + out + (0 if resident else w_stream)
        fixed = (2 * w_vmem if resident else 0) + (256 << 10)   # weight + bias/etc
        return 2 * per_iter + fixed                         # double-buffered

    m_pad128 = _round_up(m, 128)
    tm = min(1024, m_pad128)
    while tm > 128 and footprint(tm) > (32 << 20):
        tm = max(128, tm // 2 // 128 * 128)
    # Megacore (v7x): keep at least two M blocks when the problem allows it.
    if m_pad128 >= 256:
        tm = min(tm, max(128, (m_pad128 // 2) // 128 * 128))
    vmem_limit = int(min(footprint(tm) + (8 << 20), 48 << 20))
    return tm, tn, resident, vmem_limit


def _conv_gemm(patches, w_bf16, b_mean, b_log_sigma, eps_b, *, tm, tn,
               weight_resident, vmem_limit, out_dtype):
    m_pad, kk = patches.shape
    _, c_out = w_bf16.shape
    grid_m = m_pad // tm

    if weight_resident:
        grid = (grid_m,)
        p_spec = pl.BlockSpec((tm, kk), lambda i: (i, 0))
        w_spec = pl.BlockSpec((kk, c_out), lambda i: (0, 0))      # fetched once
        b_spec = pl.BlockSpec((1, c_out), lambda i: (0, 0))
        o_spec = pl.BlockSpec((tm, c_out), lambda i: (i, 0))
        dims = ("parallel",)
    else:
        grid_n = c_out // tn
        grid = (grid_m, grid_n)
        p_spec = pl.BlockSpec((tm, kk), lambda i, j: (i, 0))
        w_spec = pl.BlockSpec((kk, tn), lambda i, j: (0, j))
        b_spec = pl.BlockSpec((1, tn), lambda i, j: (0, j))
        o_spec = pl.BlockSpec((tm, tn), lambda i, j: (i, j))
        dims = ("parallel", "parallel")

    out_bytes = jnp.dtype(out_dtype).itemsize
    flops = 2 * m_pad * kk * c_out
    w_reads = 1 if weight_resident else grid_m
    bytes_accessed = (m_pad * kk * 2                     # patch stream (bf16)
                      + w_reads * kk * c_out * 2         # sampled weight (bf16)
                      + 3 * c_out * 4                    # bias params / eps
                      + m_pad * c_out * out_bytes)       # output

    return pl.pallas_call(
        _gemm_bias_kernel,
        out_shape=jax.ShapeDtypeStruct((m_pad, c_out), out_dtype),
        grid_spec=pltpu.PrefetchScalarGridSpec(
            num_scalar_prefetch=0,
            grid=grid,
            in_specs=[p_spec, w_spec, b_spec, b_spec, b_spec],
            out_specs=o_spec,
        ),
        compiler_params=pltpu.CompilerParams(
            dimension_semantics=dims,
            vmem_limit_bytes=vmem_limit),
        cost_estimate=pl.CostEstimate(
            flops=int(flops),
            transcendentals=int(grid_m * c_out),
            bytes_accessed=int(bytes_accessed)),
    )(patches, w_bf16, b_mean, b_log_sigma, eps_b)


# ---------------------------------------------------------------------------
# Glue: im2col extraction (pure data movement, one XLA fusion), NCHW input.
# ---------------------------------------------------------------------------
def _im2col(x, k, stride):
    # x: [N, Cin, H, W] -> [N*OH*OW, Cin*K*K], flattened in (Cin, kh, kw) order
    # to match the PyTorch OIHW weight flattening.
    n, c, h, w = x.shape
    oh = (h - k) // stride + 1
    ow = (w - k) // stride + 1
    cols = []
    for kh in range(k):
        for kw in range(k):
            cols.append(x[:, :, kh:kh + stride * oh:stride,
                              kw:kw + stride * ow:stride])   # [N, Cin, OH, OW]
    p = jnp.stack(cols, axis=2)                  # [N, Cin, K*K, OH, OW]
    p = jnp.transpose(p, (0, 3, 4, 1, 2))        # [N, OH, OW, Cin, K*K]
    return p.reshape(n * oh * ow, c * k * k), oh, ow


class BayesianConv2dPallas:
    """JAX/Pallas port of BayesianConv2d (forward pass only)."""

    def __init__(self, in_channels, out_channels, kernel_size, stride, key):
        self.in_channels = in_channels
        self.out_channels = out_channels
        self.kernel_size = kernel_size
        self.stride = stride

        init_std = 1.0 / math.sqrt(in_channels * kernel_size * kernel_size)
        k_w, k_b = jax.random.split(key)
        w_shape = (out_channels, in_channels, kernel_size, kernel_size)
        # Canonical (PyTorch-layout) parameters.
        self.weight_mean = jax.random.uniform(
            k_w, w_shape, jnp.float32, -init_std, init_std)
        self.weight_log_sigma = jnp.full(w_shape, math.log(init_std), jnp.float32)
        self.bias_mean = jax.random.uniform(
            k_b, (out_channels,), jnp.float32, -init_std, init_std)
        self.bias_log_sigma = jnp.full((out_channels,), math.log(init_std),
                                       jnp.float32)

        # Kernel-ready layouts hoisted out of the per-call path:
        # weights pre-transposed to [KK, Cout], biases as [1, Cout] rows.
        kk = in_channels * kernel_size * kernel_size
        self._kk = kk
        self._wm_t = self.weight_mean.reshape(out_channels, kk).T
        self._wls_t = self.weight_log_sigma.reshape(out_channels, kk).T
        self._bm = self.bias_mean.reshape(1, out_channels)
        self._bls = self.bias_log_sigma.reshape(1, out_channels)

    def __call__(self, x, key=None, train=True, out_layout="NCHW",
                 out_dtype=jnp.float32):
        # x: [N, Cin, H, W] (NCHW, matching F.conv2d).
        n = x.shape[0]
        c_out = self.out_channels
        kk = self._kk

        # im2col in bf16 (halves the HBM traffic of the K*K-expanded patches).
        # TODO(synk): fuse im2col into the GEMM kernel via manual strided DMA
        # from an NHWC input kept in HBM.
        patches, oh, ow = _im2col(x.astype(jnp.bfloat16), self.kernel_size,
                                  self.stride)
        m = patches.shape[0]

        tm, tn, resident, vmem_limit = _plan_gemm(
            m, kk, c_out, jnp.dtype(out_dtype).itemsize)
        m_pad = _round_up(m, tm)
        if m_pad != m:
            patches = jnp.pad(patches, ((0, m_pad - m), (0, 0)))

        if train:
            if key is None:
                raise ValueError("train=True requires a PRNG key")
            k_w, k_b = jax.random.split(key)
            eps_w = jax.random.normal(k_w, (kk, c_out), jnp.float32)
            eps_b = jax.random.normal(k_b, (1, c_out), jnp.float32)
            w_bf16 = _sample_weight(self._wm_t, self._wls_t, eps_w)
        else:
            # Eval: mean-only path.  eps_b = 0 turns the in-GEMM bias sampling
            # into a plain mean-bias add; no weight sampling work at all.
            eps_b = jnp.zeros((1, c_out), jnp.float32)
            w_bf16 = self._wm_t.astype(jnp.bfloat16)

        out_flat = _conv_gemm(patches, w_bf16, self._bm, self._bls, eps_b,
                              tm=tm, tn=tn, weight_resident=resident,
                              vmem_limit=vmem_limit, out_dtype=out_dtype)
        out = out_flat[:m, :].reshape(n, oh, ow, c_out)          # NHWC
        if out_layout == "NHWC":
            return out          # avoids an output-sized transpose copy
        return jnp.transpose(out, (0, 3, 1, 2))                  # NCHW


# ---------------------------------------------------------------------------
# Pure-JAX reference for verification (bf16-consistent operands, f32 accum).
# ---------------------------------------------------------------------------
def _reference_forward(module, x, eps_w_t, eps_b):
    c_out, c_in, k = module.out_channels, module.in_channels, module.kernel_size
    w = module.weight_mean + jnp.exp(module.weight_log_sigma / 2.0) * \
        eps_w_t.T.reshape(c_out, c_in, k, k)
    b = module.bias_mean + jnp.exp(module.bias_log_sigma / 2.0) * \
        eps_b.reshape(c_out)
    y = jax.lax.conv_general_dilated(
        x.astype(jnp.bfloat16), w.astype(jnp.bfloat16),
        window_strides=(module.stride, module.stride), padding="VALID",
        dimension_numbers=("NCHW", "OIHW", "NCHW"),
        preferred_element_type=jnp.float32)
    return y + b[None, :, None, None]


if __name__ == "__main__":
    key = jax.random.PRNGKey(0)
    k_init, k_x, k_sample = jax.random.split(key, 3)

    in_channels, out_channels, kernel_size, stride = 4, 8, 3, 2
    module = BayesianConv2dPallas(in_channels, out_channels, kernel_size,
                                  stride, k_init)

    x = jax.random.normal(k_x, (2, 4, 16, 16), jnp.float32)   # NCHW

    # Train-mode forward (weights sampled with deterministic eps).
    y = jax.block_until_ready(module(x, key=k_sample, train=True))
    assert y.shape == (2, 8, 7, 7), y.shape

    # Verify against a pure-JAX conv using the identical sampled noise.
    kk = in_channels * kernel_size * kernel_size
    k_w, k_b = jax.random.split(k_sample)
    eps_w = jax.random.normal(k_w, (kk, out_channels), jnp.float32)
    eps_b = jax.random.normal(k_b, (1, out_channels), jnp.float32)
    y_ref = _reference_forward(module, x, eps_w, eps_b)
    max_err = float(jnp.max(jnp.abs(y - y_ref)))
    assert jnp.allclose(y, y_ref, atol=2e-2, rtol=2e-2), max_err

    # Eval-mode (mean-only) and NHWC (no-transpose) paths also exercised.
    y_eval = jax.block_until_ready(module(x, train=False))
    assert y_eval.shape == (2, 8, 7, 7)
    y_nhwc = jax.block_until_ready(
        module(x, key=k_sample, train=True, out_layout="NHWC"))
    assert jnp.allclose(jnp.transpose(y_nhwc, (0, 3, 1, 2)), y,
                        atol=1e-6, rtol=1e-6)

    print("KERNEL_OK")
</pallas_src>

<mosaic_0001>
module attributes {stable_mosaic.version = 11 : i64} {
  func.func @_sample_weight_kernel(%arg0: i32, %arg1: i32, %arg2: memref<36x8xf32, #tpu.memory_space<vmem>>, %arg3: memref<36x8xf32, #tpu.memory_space<vmem>>, %arg4: memref<36x8xf32, #tpu.memory_space<vmem>>, %arg5: memref<36x8xbf16, #tpu.memory_space<vmem>>) attributes {dimension_semantics = [#tpu.dimension_semantics<parallel>, #tpu.dimension_semantics<parallel>], iteration_bounds = array<i64: 1, 1>, scalar_prefetch = 0 : i64, scratch_operands = 0 : i64, tpu.core_type = #tpu.core_type<tc>, window_params = [{transform_indices = @transform_0, window_bounds = array<i64: 36, 8>}, {transform_indices = @transform_1, window_bounds = array<i64: 36, 8>}, {transform_indices = @transform_2, window_bounds = array<i64: 36, 8>}, {transform_indices = @transform_3, window_bounds = array<i64: 36, 8>}]} {
    %c0 = arith.constant 0 : index
    %c0_0 = arith.constant 0 : index
    %0 = vector.load %arg2[%c0, %c0_0] : memref<36x8xf32, #tpu.memory_space<vmem>>, vector<36x8xf32>
    %c0_1 = arith.constant 0 : index
    %c0_2 = arith.constant 0 : index
    %1 = vector.load %arg3[%c0_1, %c0_2] : memref<36x8xf32, #tpu.memory_space<vmem>>, vector<36x8xf32>
    %cst = arith.constant 5.000000e-01 : f32
    %2 = vector.broadcast %cst : f32 to vector<36x8xf32>
    %3 = arith.mulf %1, %2 : vector<36x8xf32>
    %4 = math.exp %3 : vector<36x8xf32>
    %c0_3 = arith.constant 0 : index
    %c0_4 = arith.constant 0 : index
    %5 = vector.load %arg4[%c0_3, %c0_4] : memref<36x8xf32, #tpu.memory_space<vmem>>, vector<36x8xf32>
    %6 = arith.mulf %4, %5 : vector<36x8xf32>
    %7 = arith.addf %0, %6 : vector<36x8xf32>
    %8 = arith.truncf %7 : vector<36x8xf32> to vector<36x8xbf16>
    %c0_5 = arith.constant 0 : index
    %c0_6 = arith.constant 0 : index
    %9 = vector.load %arg5[%c0_5, %c0_6] : memref<36x8xbf16, #tpu.memory_space<vmem>>, vector<36x8xbf16>
    tpu.vector_store %arg5[%c0_5, %c0_6], %8 {strides = array<i32>} : memref<36x8xbf16, #tpu.memory_space<vmem>>, vector<36x8xbf16>,
    return
  }
  func.func @transform_0(%arg0: i32, %arg1: i32) -> (i32, i32) {
    %c0_i32 = arith.constant 0 : i32
    return %arg0, %arg1 : i32, i32
  }
  func.func @transform_1(%arg0: i32, %arg1: i32) -> (i32, i32) {
    %c0_i32 = arith.constant 0 : i32
    return %arg0, %arg1 : i32, i32
  }
  func.func @transform_2(%arg0: i32, %arg1: i32) -> (i32, i32) {
    %c0_i32 = arith.constant 0 : i32
    return %arg0, %arg1 : i32, i32
  }
  func.func @transform_3(%arg0: i32, %arg1: i32) -> (i32, i32) {
    %c0_i32 = arith.constant 0 : i32
    return %arg0, %arg1 : i32, i32
  }
}

</mosaic_0001>

<llo_original>
// kernel: tpu_custom_call.1
$region0: #{tpu_custom_call.1}
  #allocation0 [shape = 'u32[]', space=smem, size = 0x4, offset = 0x4, fixed_abs, tag = 'smem constant byte address 0x4 - core index']
  #allocation1 [shape = 'u32[144,128]{1,0:T(1,128)}', space=vmem, size = 0x12000, scoped, tag = 'internal scratch']
  %s0 = inlined_call_operand.vmem [shape: f32[36,8], index: 0, kind: input, shape index: {}]
  %s1 = inlined_call_operand.vmem [shape: f32[36,8], index: 1, kind: input, shape index: {}]
  %s2 = inlined_call_operand.vmem [shape: f32[36,8], index: 2, kind: input, shape index: {}]
  %s3 = inlined_call_operand.vmem [shape: bf16[36,8], index: 3, kind: output, shape index: {}]
  %s4 = sld [smem:[#allocation0]]
  $region22: #{tpu_custom_call.1} parent=0
    _
  %s6 = ssub.s32 1, %s4
  %s7 = scalar_select 0, %s6, %s4
  // Predicated region
  $region2: #{tpu_custom_call.1} parent=0 // pred_check
    _
  $region3: #{tpu_custom_call.1} parent=0 // pred_check_branch
    %9 = sbr.rel (0) target = $region5
  $region4: #{tpu_custom_call.1} parent=0 // pred_region
    _
  $region5: #{tpu_custom_call.1} parent=0 // pred_fallthru
    _
  // Predicated region
  $region6: #{tpu_custom_call.1} parent=0 // pred_check
    _
  $region7: #{tpu_custom_call.1} parent=0 // pred_check_branch
    %11 = sbr.rel (0) target = $region9
  $region8: #{tpu_custom_call.1} parent=0 // pred_region
    _
  $region9: #{tpu_custom_call.1} parent=0 // pred_fallthru
    _
  // Predicated region
  $region10: #{tpu_custom_call.1} parent=0 // pred_check
    _
  $region11: #{tpu_custom_call.1} parent=0 // pred_check_branch
    %13 = sbr.rel (0) target = $region13
  $region12: #{tpu_custom_call.1} parent=0 // pred_region
    _
  $region13: #{tpu_custom_call.1} parent=0 // pred_fallthru
    _
  %v14 = vld [vmem:[%s0] sm:$0xff]
  %v15 = vld [vmem:[%s0 + $0x8] sm:$0xff]
  %v16 = vld [vmem:[%s0 + $0x10] sm:$0xff]
  %v17 = vld [vmem:[%s0 + $0x18] sm:$0xff]
  %v18 = vld [vmem:[%s0 + $0x20] sm:$0xf]
  %v19 = vld [vmem:[%s1] sm:$0xff]
  %v20 = vld [vmem:[%s1 + $0x8] sm:$0xff]
  %v21 = vld [vmem:[%s1 + $0x10] sm:$0xff]
  %v22 = vld [vmem:[%s1 + $0x18] sm:$0xff]
  %v23 = vld [vmem:[%s1 + $0x20] sm:$0xf]
  %v24 = vmul.f32 %v19, 0.5
  %v25 = vmul.f32 %v20, 0.5
  %v26 = vmul.f32 %v21, 0.5
  %v27 = vmul.f32 %v22, 0.5
  %v28 = vmul.f32 %v23, 0.5
  %v29 = vmul.f32 %v24, 1.442695
  %v30 = vpow.pop %v29
  %v31 = vmul.f32 %v25, 1.442695
  %v32 = vpow.pop %v31
  %v33 = vmul.f32 %v26, 1.442695
  %v34 = vpow.pop %v33
  %v35 = vmul.f32 %v27, 1.442695
  %v36 = vpow.pop %v35
  %v37 = vmul.f32 %v28, 1.442695
  %v38 = vpow.pop %v37
  %v39 = vld [vmem:[%s2] sm:$0xff]
  %v40 = vld [vmem:[%s2 + $0x8] sm:$0xff]
  %v41 = vld [vmem:[%s2 + $0x10] sm:$0xff]
  %v42 = vld [vmem:[%s2 + $0x18] sm:$0xff]
  %v43 = vld [vmem:[%s2 + $0x20] sm:$0xf]
  %v44 = vmul.f32 %v30, %v39
  %v45 = vmul.f32 %v32, %v40
  %v46 = vmul.f32 %v34, %v41
  %v47 = vmul.f32 %v36, %v42
  %v48 = vmul.f32 %v38, %v43
  %v49 = vadd.f32 %v14, %v44
  %v50 = vadd.f32 %v15, %v45
  %v51 = vadd.f32 %v16, %v46
  %v52 = vadd.f32 %v17, %v47
  %v53 = vadd.f32 %v18, %v48
  %v54 = vpack.c.bf16 %v50, %v49
  %v55 = vpack.c.bf16 %v52, %v51
  %v56 = vpack.c.bf16 %v53, %v53
  %v60 = vunpack.c.l.b16 %v54
  %v61 = vunpack.c.h.b16 %v54
  %v62 = vunpack.c.l.b16 %v55
  %v63 = vunpack.c.h.b16 %v55
  %v64 = vunpack.c.l.b16 %v56
  %v65 = vpack.c.b16 %v60, %v60
  %v66 = vpack.c.b16 %v61, %v61
  %v67 = vpack.c.b16 %v62, %v62
  %v68 = vpack.c.b16 %v63, %v63
  %v69 = vpack.c.b16 %v64, %v64
  %vm75 = vcmask 60416
  %76 = vst.msk [vmem:[%s3] sm:$0xf] %vm75, %v65
  %77 = vst.msk [vmem:[%s3 + $0x4] sm:$0xf] %vm75, %v66
  %78 = vst.msk [vmem:[%s3 + $0x8] sm:$0xf] %vm75, %v67
  %79 = vst.msk [vmem:[%s3 + $0xc] sm:$0xf] %vm75, %v68
  %vm80 = vcmask 58368
  %81 = vst.msk [vmem:[%s3 + $0x10] sm:$0x3] %vm80, %v69
  // Predicated region
  $region14: #{tpu_custom_call.1} parent=0 // pred_check
    _
  $region15: #{tpu_custom_call.1} parent=0 // pred_check_branch
    %83 = sbr.rel (0) target = $region17
  $region16: #{tpu_custom_call.1} parent=0 // pred_region
    _
  $region17: #{tpu_custom_call.1} parent=0 // pred_fallthru
    _
  // Predicated region
  $region18: #{tpu_custom_call.1} parent=0 // pred_check
    _
  $region19: #{tpu_custom_call.1} parent=0 // pred_check_branch
    %85 = sbr.rel (0) target = $region21
  $region20: #{tpu_custom_call.1} parent=0 // pred_region
    _
  $region21: #{tpu_custom_call.1} parent=0 // pred_fallthru
    _

</llo_original>
